<compile_context>
chip_gen: v5e
topology: v5e:2x2
jax: 0.10.0
libtpu: 0.0.40
codegen_flags: <defaults>
</compile_context>

<pallas_src>
import functools

import jax
import jax.numpy as jnp
from jax import lax
from jax.experimental import pallas as pl
from jax.experimental.pallas import tpu as pltpu


_LANE = 128
_TOKEN_TILE_BYTES = 4 * 1024 * 1024     # per-tile budget for the two-pass fallback
_TARGET_STEP_BYTES = 4 * 1024 * 1024    # desired per-grid-step slab for the fused path
_MAX_BATCH_BLOCK = 16                   # per-row conv is unrolled; keep code size bounded


def _round_up(v: int, m: int) -> int:
    return (v + m - 1) // m * m


def _hw_params():
    """Returns (fused_slab_budget_bytes, vmem_limit_cap_bytes, num_cores)."""
    kind = ""
    try:
        kind = jax.devices()[0].device_kind.lower().replace(" ", "")
    except Exception:
        pass
    vmem_cap = None
    num_cores = 1
    try:
        info = pltpu.get_tpu_info()
        v = getattr(info, "vmem_capacity_bytes", None)
        if v:
            vmem_cap = int(v)
        for name in ("num_cores", "core_count", "num_tensorcores"):
            c = getattr(info, name, None)
            if c:
                num_cores = max(num_cores, int(c))
                break
    except Exception:
        pass
    if vmem_cap is None:
        # Conservative default (v7x-safe); v5/v6 generations have 128 MiB physical VMEM.
        vmem_cap = (128 << 20) if ("v5" in kind or "v6" in kind) else (64 << 20)
    if "7" in kind:                       # v7x: 64 MiB per TensorCore, 2 TensorCores per chip
        vmem_cap = min(vmem_cap, 64 << 20)
        num_cores = max(num_cores, 2)
    if vmem_cap >= (100 << 20):           # v5e / v6e: 2 in + 2 out buffers of 24 MiB ~= 96 MiB
        return 24 << 20, 100 << 20, num_cores
    return 12 << 20, 56 << 20, num_cores  # v7x / unknown: 4 x 12 MiB = 48 MiB <= 56 MiB cap


def _vmem_limit(working_set_bytes: int, cap: int) -> int:
    return int(min(max(working_set_bytes + (8 << 20), 32 << 20), cap))


def _conv_sigmoid_row(w_ref, m, k_size: int):
    """Zero-padded 1D conv along the lane axis of m:(1, Cp) f32, then sigmoid."""
    cp = m.shape[-1]
    pad = (k_size - 1) // 2
    lane = lax.broadcasted_iota(jnp.int32, m.shape, dimension=1)
    acc = w_ref[pad] * m                          # center tap (offset 0): no roll, no mask
    for j in range(k_size):
        if j == pad:
            continue
        off = j - pad                             # out[c] uses m[c + off]
        shifted = pltpu.roll(m, shift=(-off) % cp, axis=1)
        valid = jnp.logical_and(lane + off >= 0, lane + off < cp)
        acc = acc + w_ref[j] * jnp.where(valid, shifted, 0.0)
    return jax.nn.sigmoid(acc)


# ----------------------------------------------------------------------------- fused (1-pass)
def _eca_fused_kernel(w_ref, x_ref, o_ref, *, k_size: int, inv_n: float):
    # w_ref: SMEM f32[k]; x_ref/o_ref: VMEM (b_blk, N, Cp) in the I/O dtype.
    # Unrolled over the small static batch block; each row is the simple 2-D pattern:
    # f32 token-sum -> conv+sigmoid on (1, Cp) -> scale in the I/O dtype (y cast down).
    for i in range(x_ref.shape[0]):
        m = jnp.sum(x_ref[i].astype(jnp.float32), axis=0, keepdims=True) * jnp.float32(inv_n)
        y = _conv_sigmoid_row(w_ref, m, k_size)            # (1, Cp) f32
        # Re-read x for the scale so the row isn't kept live across conv/sigmoid.
        o_ref[i] = x_ref[i] * y.astype(o_ref.dtype)


def _eca_fused(xp, conv_w, k_size: int, b_blk: int, vmem_cap: int):
    b, n, cp = xp.shape
    itemsize = xp.dtype.itemsize
    blk_bytes = b_blk * n * cp * itemsize
    ws = 4 * blk_bytes                                     # 2 in + 2 out double-buffered
    if itemsize < 4:
        ws += n * cp * 4                                   # per-row f32 reduction temporary
    kernel = functools.partial(_eca_fused_kernel, k_size=k_size, inv_n=1.0 / n)
    return pl.pallas_call(
        kernel,
        out_shape=jax.ShapeDtypeStruct((b, n, cp), xp.dtype),
        grid_spec=pl.GridSpec(
            grid=(b // b_blk,),
            in_specs=[
                pl.BlockSpec(memory_space=pltpu.MemorySpace.SMEM),      # conv weights
                pl.BlockSpec((b_blk, n, cp), lambda i: (i, 0, 0)),      # x batch-block
            ],
            out_specs=pl.BlockSpec((b_blk, n, cp), lambda i: (i, 0, 0)),
        ),
        compiler_params=pltpu.CompilerParams(
            dimension_semantics=("parallel",),
            vmem_limit_bytes=_vmem_limit(ws, vmem_cap),
        ),
    )(conv_w, xp)


# --------------------------------------------------------------------------- tiled (2-pass)
def _eca_sum_kernel(x_ref, s_ref):
    # Accumulate per-channel partial sums into the resident (1, Cp) output block.
    @pl.when(pl.program_id(2) == 0)
    def _():
        s_ref[...] = jnp.zeros_like(s_ref)

    s_ref[...] += jnp.sum(x_ref[...].astype(jnp.float32), axis=0, keepdims=True)


def _eca_scale_kernel(y_ref, x_ref, o_ref):
    o_ref[...] = x_ref[...] * y_ref[...].astype(o_ref.dtype)


def _eca_tiled(xp, conv_w, k_size: int, token_tile, vmem_cap: int):
    b, n_tokens, cp = xp.shape
    itemsize = xp.dtype.itemsize
    sub = max(8, 32 // itemsize)                           # 8 f32 / 16 bf16 / 32 int8 sublanes
    if token_tile is None:
        rows = max(sub, (_TOKEN_TILE_BYTES // (cp * itemsize)) // sub * sub)
        token_tile = int(min(rows, _round_up(n_tokens, sub)))
    token_tile = max(sub, (int(token_tile) // sub) * sub)

    n_tiles = pl.cdiv(n_tokens, token_tile)
    # Split the reduction into 2 "parallel" chunks when there is no batch parallelism so both
    # v7x TensorCores contribute to pass 1 (harmless on single-core chips).
    chunks = 2 if (b == 1 and n_tiles >= 2) else 1
    np_ = _round_up(n_tokens, token_tile * chunks)
    if np_ != n_tokens:                                    # zero rows: don't affect the sum
        xp = jnp.pad(xp, ((0, 0), (0, np_ - n_tokens), (0, 0)))
    tpc = np_ // token_tile // chunks                      # tiles per chunk

    tile_bytes = token_tile * cp * itemsize
    ws = 4 * tile_bytes + (token_tile * cp * 4 if itemsize < 4 else 0)
    vmem_limit = _vmem_limit(ws, vmem_cap)

    # Pass 1: per-(batch, chunk) partial channel sums   =>   (B, chunks, Cp) f32.
    partial = pl.pallas_call(
        _eca_sum_kernel,
        out_shape=jax.ShapeDtypeStruct((b, chunks, cp), jnp.float32),
        grid_spec=pl.GridSpec(
            grid=(b, chunks, tpc),
            in_specs=[pl.BlockSpec((pl.Squeezed(), token_tile, cp),
                                   lambda i, c, j: (i, c * tpc + j, 0))],
            out_specs=pl.BlockSpec((pl.Squeezed(), 1, cp), lambda i, c, j: (i, c, 0)),
        ),
        compiler_params=pltpu.CompilerParams(
            dimension_semantics=("parallel", "parallel", "arbitrary"),  # reduction axis last
            vmem_limit_bytes=vmem_limit,
        ),
    )(xp)

    # Tiny epilogue (plain JAX, (B, Cp) only): mean -> zero-padded conv -> sigmoid.
    pad = (k_size - 1) // 2
    m = jnp.sum(partial, axis=1) * jnp.float32(1.0 / n_tokens)          # mean over unpadded tokens
    m_pad = jnp.pad(m, ((0, 0), (pad, pad)))
    y = sum(conv_w[j] * m_pad[:, j:j + cp] for j in range(k_size))
    y = jax.nn.sigmoid(y)[:, None, :]                                   # (B, 1, Cp) f32

    # Pass 2: out = x * y  (embarrassingly parallel over batch and token tiles).
    out = pl.pallas_call(
        _eca_scale_kernel,
        out_shape=jax.ShapeDtypeStruct((b, np_, cp), xp.dtype),
        grid_spec=pl.GridSpec(
            grid=(b, np_ // token_tile),
            in_specs=[
                pl.BlockSpec((pl.Squeezed(), 1, cp), lambda i, j: (i, 0, 0)),
                pl.BlockSpec((pl.Squeezed(), token_tile, cp), lambda i, j: (i, j, 0)),
            ],
            out_specs=pl.BlockSpec((pl.Squeezed(), token_tile, cp), lambda i, j: (i, j, 0)),
        ),
        compiler_params=pltpu.CompilerParams(
            dimension_semantics=("parallel", "parallel"),
            vmem_limit_bytes=vmem_limit,
        ),
    )(y, xp)
    return out[:, :n_tokens, :] if np_ != n_tokens else out


# --------------------------------------------------------------------------------- wrapper
def eca_layer_1d(x: jax.Array, conv_w: jax.Array, k_size: int = 3, *,
                 token_tile=None, force_tiled: bool = False) -> jax.Array:
    """x: (B, N, C) f32/bf16; conv_w: Conv1d(1, 1, k, bias=False) weight (any shape, k elems)."""
    b, n, c = x.shape
    assert k_size % 2 == 1, "ECA uses an odd kernel size"
    conv_w = jnp.asarray(conv_w, jnp.float32).reshape(-1)
    assert conv_w.shape == (k_size,)

    fused_budget, vmem_cap, num_cores = _hw_params()

    # Lane-dense channel padding (zero channels keep mean/conv semantics; sliced off below).
    cp = _round_up(c, _LANE)
    xp = jnp.pad(x, ((0, 0), (0, 0), (0, cp - c))) if cp != c else x

    itemsize = x.dtype.itemsize
    per_batch_bytes = n * cp * itemsize
    per_batch_f32 = n * cp * 4             # gate on f32-equivalent slab (covers widen temps)
    use_fused = (not force_tiled) and (token_tile is None) and per_batch_f32 <= fused_budget
    # On a 2-TensorCore chip with a single (large) batch, the two-pass path uses both cores.
    if use_fused and num_cores >= 2 and b == 1 and per_batch_bytes >= (2 << 20):
        use_fused = False

    if use_fused:
        per_batch_ws = 4 * per_batch_bytes + (n * cp * 4 if itemsize < 4 else 0)
        b_blk = min(b, _MAX_BATCH_BLOCK,
                    max(1, _TARGET_STEP_BYTES // per_batch_bytes),
                    max(1, (vmem_cap - (8 << 20)) // per_batch_ws))
        if b >= 2:
            b_blk = min(b_blk, max(1, b // 2))   # keep >=2 grid steps (pipelining / megacore)
        while b % b_blk != 0:                    # avoid batch padding: pick a divisor of B
            b_blk -= 1
        out = _eca_fused(xp, conv_w, k_size, b_blk, vmem_cap)
    else:
        out = _eca_tiled(xp, conv_w, k_size, token_tile, vmem_cap)

    return out[:, :, :c] if cp != c else out


def eca_layer_1d_ref(x, conv_w, k_size=3):
    """Pure-JAX f32 reference mirroring the PyTorch forward."""
    pad = (k_size - 1) // 2
    xf = x.astype(jnp.float32)
    m = jnp.mean(xf, axis=1)                                  # (B, C)
    m_pad = jnp.pad(m, ((0, 0), (pad, pad)))                  # zero padding
    wf = jnp.asarray(conv_w, jnp.float32).reshape(-1)
    y = sum(wf[j] * m_pad[:, j:j + x.shape[-1]] for j in range(k_size))
    y = jax.nn.sigmoid(y)
    return xf * y[:, None, :]


if __name__ == "__main__":
    keys = jax.random.split(jax.random.PRNGKey(0), 6)
    k_size = 3
    # Deterministic Conv1d(1, 1, k, bias=False) weight, flattened to (k,).
    conv_w = (jax.random.uniform(keys[0], (k_size,), dtype=jnp.float32) - 0.5) * (
        2.0 / jnp.sqrt(jnp.float32(k_size))
    )

    # 1) fused path, f32, batch-blocked (b_blk > 1).
    x = jax.random.normal(keys[1], (8, 8, 16), dtype=jnp.float32)
    out = jax.block_until_ready(eca_layer_1d(x, conv_w, k_size=k_size))
    assert out.shape == x.shape
    assert jnp.allclose(out, eca_layer_1d_ref(x, conv_w, k_size), atol=1e-5, rtol=1e-5), \
        "fused f32 mismatch"

    # 2) fused path, bf16 I/O with non-multiple-of-128 channels (channel padding + f32 accum).
    x2 = jax.random.normal(keys[2], (4, 16, 20), dtype=jnp.bfloat16)
    out2 = jax.block_until_ready(eca_layer_1d(x2, conv_w, k_size=k_size))
    assert out2.dtype == jnp.bfloat16 and out2.shape == x2.shape
    assert jnp.allclose(out2.astype(jnp.float32), eca_layer_1d_ref(x2, conv_w, k_size),
                        atol=2e-2, rtol=2e-2), "fused bf16 mismatch"

    # 3) tiled two-pass path, f32 (forced via token_tile; N not a multiple of the tile).
    x3 = jax.random.normal(keys[3], (2, 40, 16), dtype=jnp.float32)
    out3 = jax.block_until_ready(eca_layer_1d(x3, conv_w, k_size=k_size, token_tile=16))
    assert jnp.allclose(out3, eca_layer_1d_ref(x3, conv_w, k_size), atol=1e-5, rtol=1e-5), \
        "tiled f32 mismatch"

    # 4) tiled path with B == 1 (exercises the 2-chunk parallel reduction split).
    x4 = jax.random.normal(keys[4], (1, 40, 16), dtype=jnp.float32)
    out4 = jax.block_until_ready(eca_layer_1d(x4, conv_w, k_size=k_size, token_tile=16))
    assert jnp.allclose(out4, eca_layer_1d_ref(x4, conv_w, k_size), atol=1e-5, rtol=1e-5), \
        "tiled b=1 mismatch"

    # 5) tiled path, bf16, auto token tile (16-sublane alignment).
    x5 = jax.random.normal(keys[5], (2, 24, 16), dtype=jnp.bfloat16)
    out5 = jax.block_until_ready(eca_layer_1d(x5, conv_w, k_size=k_size, force_tiled=True))
    assert jnp.allclose(out5.astype(jnp.float32), eca_layer_1d_ref(x5, conv_w, k_size),
                        atol=2e-2, rtol=2e-2), "tiled bf16 mismatch"

    print("KERNEL_OK")
</pallas_src>

<mosaic_0001>
module attributes {stable_mosaic.version = 11 : i64} {
  func.func @_eca_fused_kernel(%arg0: i32, %arg1: memref<3xf32, #tpu.memory_space<smem>>, %arg2: memref<4x8x128xf32, #tpu.memory_space<vmem>>, %arg3: memref<4x8x128xf32, #tpu.memory_space<vmem>>) attributes {dimension_semantics = [#tpu.dimension_semantics<parallel>], iteration_bounds = array<i64: 2>, scalar_prefetch = 0 : i64, scratch_operands = 0 : i64, tpu.core_type = #tpu.core_type<tc>, window_params = [{transform_indices = @transform_0, window_bounds = array<i64: 3>}, {transform_indices = @transform_1, window_bounds = array<i64: 4, 8, 128>}, {transform_indices = @transform_2, window_bounds = array<i64: 4, 8, 128>}]} {
    %c0 = arith.constant 0 : index
    %c0_0 = arith.constant 0 : index
    %c0_1 = arith.constant 0 : index
    %0 = vector.load %arg2[%c0, %c0_0, %c0_1] : memref<4x8x128xf32, #tpu.memory_space<vmem>>, vector<1x8x128xf32>
    %1 = vector.shape_cast %0 : vector<1x8x128xf32> to vector<8x128xf32>
    %cst = arith.constant dense<0.000000e+00> : vector<128xf32>
    %2 = vector.multi_reduction <add>, %1, %cst [0] : vector<8x128xf32> to vector<128xf32>
    %3 = vector.shape_cast %2 : vector<128xf32> to vector<1x128xf32>
    %cst_2 = arith.constant 1.250000e-01 : f32
    %4 = vector.broadcast %cst_2 : f32 to vector<1x128xf32>
    %5 = arith.mulf %3, %4 : vector<1x128xf32>
    %6 = tpu.iota {dimensions = array<i32: 1>} : vector<1x128xi32>
    %c1 = arith.constant 1 : index
    %7 = memref.load %arg1[%c1] : memref<3xf32, #tpu.memory_space<smem>>
    %8 = vector.broadcast %7 : f32 to vector<1x128xf32>
    %9 = arith.mulf %8, %5 : vector<1x128xf32>
    %c1_i32 = arith.constant 1 : i32
    %10 = tpu.dynamic_rotate %5 by %c1_i32 dim 1 : vector<1x128xf32>, i32 -> vector<1x128xf32>
    %c-1_i32 = arith.constant -1 : i32
    %11 = vector.broadcast %c-1_i32 : i32 to vector<1x128xi32>
    %12 = arith.addi %6, %11 : vector<1x128xi32>
    %c0_i32 = arith.constant 0 : i32
    %13 = vector.broadcast %c0_i32 : i32 to vector<1x128xi32>
    %14 = arith.cmpi sge, %12, %13 : vector<1x128xi32>
    %c-1_i32_3 = arith.constant -1 : i32
    %15 = vector.broadcast %c-1_i32_3 : i32 to vector<1x128xi32>
    %16 = arith.addi %6, %15 : vector<1x128xi32>
    %c128_i32 = arith.constant 128 : i32
    %17 = vector.broadcast %c128_i32 : i32 to vector<1x128xi32>
    %18 = arith.cmpi slt, %16, %17 : vector<1x128xi32>
    %19 = arith.andi %14, %18 : vector<1x128xi1>
    %c0_4 = arith.constant 0 : index
    %20 = memref.load %arg1[%c0_4] : memref<3xf32, #tpu.memory_space<smem>>
    %cst_5 = arith.constant 0.000000e+00 : f32
    %21 = vector.broadcast %cst_5 : f32 to vector<1x128xf32>
    %22 = arith.select %19, %10, %21 : vector<1x128xi1>, vector<1x128xf32>
    %23 = vector.broadcast %20 : f32 to vector<1x128xf32>
    %24 = arith.mulf %23, %22 : vector<1x128xf32>
    %25 = arith.addf %9, %24 : vector<1x128xf32>
    %c127_i32 = arith.constant 127 : i32
    %26 = tpu.dynamic_rotate %5 by %c127_i32 dim 1 : vector<1x128xf32>, i32 -> vector<1x128xf32>
    %c1_i32_6 = arith.constant 1 : i32
    %27 = vector.broadcast %c1_i32_6 : i32 to vector<1x128xi32>
    %28 = arith.addi %6, %27 : vector<1x128xi32>
    %c0_i32_7 = arith.constant 0 : i32
    %29 = vector.broadcast %c0_i32_7 : i32 to vector<1x128xi32>
    %30 = arith.cmpi sge, %28, %29 : vector<1x128xi32>
    %c1_i32_8 = arith.constant 1 : i32
    %31 = vector.broadcast %c1_i32_8 : i32 to vector<1x128xi32>
    %32 = arith.addi %6, %31 : vector<1x128xi32>
    %c128_i32_9 = arith.constant 128 : i32
    %33 = vector.broadcast %c128_i32_9 : i32 to vector<1x128xi32>
    %34 = arith.cmpi slt, %32, %33 : vector<1x128xi32>
    %35 = arith.andi %30, %34 : vector<1x128xi1>
    %c2 = arith.constant 2 : index
    %36 = memref.load %arg1[%c2] : memref<3xf32, #tpu.memory_space<smem>>
    %cst_10 = arith.constant 0.000000e+00 : f32
    %37 = vector.broadcast %cst_10 : f32 to vector<1x128xf32>
    %38 = arith.select %35, %26, %37 : vector<1x128xi1>, vector<1x128xf32>
    %39 = vector.broadcast %36 : f32 to vector<1x128xf32>
    %40 = arith.mulf %39, %38 : vector<1x128xf32>
    %41 = arith.addf %25, %40 : vector<1x128xf32>
    %42 = arith.negf %41 : vector<1x128xf32>
    %43 = math.exp %42 : vector<1x128xf32>
    %cst_11 = arith.constant 1.000000e+00 : f32
    %44 = vector.broadcast %cst_11 : f32 to vector<1x128xf32>
    %45 = arith.addf %44, %43 : vector<1x128xf32>
    %46 = arith.divf %44, %45 : vector<1x128xf32>
    %c0_12 = arith.constant 0 : index
    %c0_13 = arith.constant 0 : index
    %c0_14 = arith.constant 0 : index
    %47 = vector.load %arg2[%c0_12, %c0_13, %c0_14] : memref<4x8x128xf32, #tpu.memory_space<vmem>>, vector<1x8x128xf32>
    %48 = vector.shape_cast %47 : vector<1x8x128xf32> to vector<8x128xf32>
    %49 = vector.broadcast %46 : vector<1x128xf32> to vector<8x128xf32>
    %50 = arith.mulf %48, %49 : vector<8x128xf32>
    %c0_15 = arith.constant 0 : index
    %c0_16 = arith.constant 0 : index
    %c0_17 = arith.constant 0 : index
    %51 = vector.load %arg3[%c0_15, %c0_16, %c0_17] : memref<4x8x128xf32, #tpu.memory_space<vmem>>, vector<1x8x128xf32>
    %52 = vector.shape_cast %51 : vector<1x8x128xf32> to vector<8x128xf32>
    %53 = vector.shape_cast %50 : vector<8x128xf32> to vector<1x8x128xf32>
    tpu.vector_store %arg3[%c0_15, %c0_16, %c0_17], %53 {strides = array<i32>} : memref<4x8x128xf32, #tpu.memory_space<vmem>>, vector<1x8x128xf32>,
    %c1_18 = arith.constant 1 : index
    %c0_19 = arith.constant 0 : index
    %c0_20 = arith.constant 0 : index
    %54 = vector.load %arg2[%c1_18, %c0_19, %c0_20] : memref<4x8x128xf32, #tpu.memory_space<vmem>>, vector<1x8x128xf32>
    %55 = vector.shape_cast %54 : vector<1x8x128xf32> to vector<8x128xf32>
    %cst_21 = arith.constant dense<0.000000e+00> : vector<128xf32>
    %56 = vector.multi_reduction <add>, %55, %cst_21 [0] : vector<8x128xf32> to vector<128xf32>
    %57 = vector.shape_cast %56 : vector<128xf32> to vector<1x128xf32>
    %cst_22 = arith.constant 1.250000e-01 : f32
    %58 = vector.broadcast %cst_22 : f32 to vector<1x128xf32>
    %59 = arith.mulf %57, %58 : vector<1x128xf32>
    %60 = tpu.iota {dimensions = array<i32: 1>} : vector<1x128xi32>
    %c1_23 = arith.constant 1 : index
    %61 = memref.load %arg1[%c1_23] : memref<3xf32, #tpu.memory_space<smem>>
    %62 = vector.broadcast %61 : f32 to vector<1x128xf32>
    %63 = arith.mulf %62, %59 : vector<1x128xf32>
    %c1_i32_24 = arith.constant 1 : i32
    %64 = tpu.dynamic_rotate %59 by %c1_i32_24 dim 1 : vector<1x128xf32>, i32 -> vector<1x128xf32>
    %c-1_i32_25 = arith.constant -1 : i32
    %65 = vector.broadcast %c-1_i32_25 : i32 to vector<1x128xi32>
    %66 = arith.addi %60, %65 : vector<1x128xi32>
    %c0_i32_26 = arith.constant 0 : i32
    %67 = vector.broadcast %c0_i32_26 : i32 to vector<1x128xi32>
    %68 = arith.cmpi sge, %66, %67 : vector<1x128xi32>
    %c-1_i32_27 = arith.constant -1 : i32
    %69 = vector.broadcast %c-1_i32_27 : i32 to vector<1x128xi32>
    %70 = arith.addi %60, %69 : vector<1x128xi32>
    %c128_i32_28 = arith.constant 128 : i32
    %71 = vector.broadcast %c128_i32_28 : i32 to vector<1x128xi32>
    %72 = arith.cmpi slt, %70, %71 : vector<1x128xi32>
    %73 = arith.andi %68, %72 : vector<1x128xi1>
    %c0_29 = arith.constant 0 : index
    %74 = memref.load %arg1[%c0_29] : memref<3xf32, #tpu.memory_space<smem>>
    %cst_30 = arith.constant 0.000000e+00 : f32
    %75 = vector.broadcast %cst_30 : f32 to vector<1x128xf32>
    %76 = arith.select %73, %64, %75 : vector<1x128xi1>, vector<1x128xf32>
    %77 = vector.broadcast %74 : f32 to vector<1x128xf32>
    %78 = arith.mulf %77, %76 : vector<1x128xf32>
    %79 = arith.addf %63, %78 : vector<1x128xf32>
    %c127_i32_31 = arith.constant 127 : i32
    %80 = tpu.dynamic_rotate %59 by %c127_i32_31 dim 1 : vector<1x128xf32>, i32 -> vector<1x128xf32>
    %c1_i32_32 = arith.constant 1 : i32
    %81 = vector.broadcast %c1_i32_32 : i32 to vector<1x128xi32>
    %82 = arith.addi %60, %81 : vector<1x128xi32>
    %c0_i32_33 = arith.constant 0 : i32
    %83 = vector.broadcast %c0_i32_33 : i32 to vector<1x128xi32>
    %84 = arith.cmpi sge, %82, %83 : vector<1x128xi32>
    %c1_i32_34 = arith.constant 1 : i32
    %85 = vector.broadcast %c1_i32_34 : i32 to vector<1x128xi32>
    %86 = arith.addi %60, %85 : vector<1x128xi32>
    %c128_i32_35 = arith.constant 128 : i32
    %87 = vector.broadcast %c128_i32_35 : i32 to vector<1x128xi32>
    %88 = arith.cmpi slt, %86, %87 : vector<1x128xi32>
    %89 = arith.andi %84, %88 : vector<1x128xi1>
    %c2_36 = arith.constant 2 : index
    %90 = memref.load %arg1[%c2_36] : memref<3xf32, #tpu.memory_space<smem>>
    %cst_37 = arith.constant 0.000000e+00 : f32
    %91 = vector.broadcast %cst_37 : f32 to vector<1x128xf32>
    %92 = arith.select %89, %80, %91 : vector<1x128xi1>, vector<1x128xf32>
    %93 = vector.broadcast %90 : f32 to vector<1x128xf32>
    %94 = arith.mulf %93, %92 : vector<1x128xf32>
    %95 = arith.addf %79, %94 : vector<1x128xf32>
    %96 = arith.negf %95 : vector<1x128xf32>
    %97 = math.exp %96 : vector<1x128xf32>
    %cst_38 = arith.constant 1.000000e+00 : f32
    %98 = vector.broadcast %cst_38 : f32 to vector<1x128xf32>
    %99 = arith.addf %98, %97 : vector<1x128xf32>
    %100 = arith.divf %98, %99 : vector<1x128xf32>
    %c1_39 = arith.constant 1 : index
    %c0_40 = arith.constant 0 : index
    %c0_41 = arith.constant 0 : index
    %101 = vector.load %arg2[%c1_39, %c0_40, %c0_41] : memref<4x8x128xf32, #tpu.memory_space<vmem>>, vector<1x8x128xf32>
    %102 = vector.shape_cast %101 : vector<1x8x128xf32> to vector<8x128xf32>
    %103 = vector.broadcast %100 : vector<1x128xf32> to vector<8x128xf32>
    %104 = arith.mulf %102, %103 : vector<8x128xf32>
    %c1_42 = arith.constant 1 : index
    %c0_43 = arith.constant 0 : index
    %c0_44 = arith.constant 0 : index
    %105 = vector.load %arg3[%c1_42, %c0_43, %c0_44] : memref<4x8x128xf32, #tpu.memory_space<vmem>>, vector<1x8x128xf32>
    %106 = vector.shape_cast %105 : vector<1x8x128xf32> to vector<8x128xf32>
    %107 = vector.shape_cast %104 : vector<8x128xf32> to vector<1x8x128xf32>
    tpu.vector_store %arg3[%c1_42, %c0_43, %c0_44], %107 {strides = array<i32>} : memref<4x8x128xf32, #tpu.memory_space<vmem>>, vector<1x8x128xf32>,
    %c2_45 = arith.constant 2 : index
    %c0_46 = arith.constant 0 : index
    %c0_47 = arith.constant 0 : index
    %108 = vector.load %arg2[%c2_45, %c0_46, %c0_47] : memref<4x8x128xf32, #tpu.memory_space<vmem>>, vector<1x8x128xf32>
    %109 = vector.shape_cast %108 : vector<1x8x128xf32> to vector<8x128xf32>
    %cst_48 = arith.constant dense<0.000000e+00> : vector<128xf32>
    %110 = vector.multi_reduction <add>, %109, %cst_48 [0] : vector<8x128xf32> to vector<128xf32>
    %111 = vector.shape_cast %110 : vector<128xf32> to vector<1x128xf32>
    %cst_49 = arith.constant 1.250000e-01 : f32
    %112 = vector.broadcast %cst_49 : f32 to vector<1x128xf32>
    %113 = arith.mulf %111, %112 : vector<1x128xf32>
    %114 = tpu.iota {dimensions = array<i32: 1>} : vector<1x128xi32>
    %c1_50 = arith.constant 1 : index
    %115 = memref.load %arg1[%c1_50] : memref<3xf32, #tpu.memory_space<smem>>
    %116 = vector.broadcast %115 : f32 to vector<1x128xf32>
    %117 = arith.mulf %116, %113 : vector<1x128xf32>
    %c1_i32_51 = arith.constant 1 : i32
    %118 = tpu.dynamic_rotate %113 by %c1_i32_51 dim 1 : vector<1x128xf32>, i32 -> vector<1x128xf32>
    %c-1_i32_52 = arith.constant -1 : i32
    %119 = vector.broadcast %c-1_i32_52 : i32 to vector<1x128xi32>
    %120 = arith.addi %114, %119 : vector<1x128xi32>
    %c0_i32_53 = arith.constant 0 : i32
    %121 = vector.broadcast %c0_i32_53 : i32 to vector<1x128xi32>
    %122 = arith.cmpi sge, %120, %121 : vector<1x128xi32>
    %c-1_i32_54 = arith.constant -1 : i32
    %123 = vector.broadcast %c-1_i32_54 : i32 to vector<1x128xi32>
    %124 = arith.addi %114, %123 : vector<1x128xi32>
    %c128_i32_55 = arith.constant 128 : i32
    %125 = vector.broadcast %c128_i32_55 : i32 to vector<1x128xi32>
    %126 = arith.cmpi slt, %124, %125 : vector<1x128xi32>
    %127 = arith.andi %122, %126 : vector<1x128xi1>
    %c0_56 = arith.constant 0 : index
    %128 = memref.load %arg1[%c0_56] : memref<3xf32, #tpu.memory_space<smem>>
    %cst_57 = arith.constant 0.000000e+00 : f32
    %129 = vector.broadcast %cst_57 : f32 to vector<1x128xf32>
    %130 = arith.select %127, %118, %129 : vector<1x128xi1>, vector<1x128xf32>
    %131 = vector.broadcast %128 : f32 to vector<1x128xf32>
    %132 = arith.mulf %131, %130 : vector<1x128xf32>
    %133 = arith.addf %117, %132 : vector<1x128xf32>
    %c127_i32_58 = arith.constant 127 : i32
    %134 = tpu.dynamic_rotate %113 by %c127_i32_58 dim 1 : vector<1x128xf32>, i32 -> vector<1x128xf32>
    %c1_i32_59 = arith.constant 1 : i32
    %135 = vector.broadcast %c1_i32_59 : i32 to vector<1x128xi32>
    %136 = arith.addi %114, %135 : vector<1x128xi32>
    %c0_i32_60 = arith.constant 0 : i32
    %137 = vector.broadcast %c0_i32_60 : i32 to vector<1x128xi32>
    %138 = arith.cmpi sge, %136, %137 : vector<1x128xi32>
    %c1_i32_61 = arith.constant 1 : i32
    %139 = vector.broadcast %c1_i32_61 : i32 to vector<1x128xi32>
    %140 = arith.addi %114, %139 : vector<1x128xi32>
    %c128_i32_62 = arith.constant 128 : i32
    %141 = vector.broadcast %c128_i32_62 : i32 to vector<1x128xi32>
    %142 = arith.cmpi slt, %140, %141 : vector<1x128xi32>
    %143 = arith.andi %138, %142 : vector<1x128xi1>
    %c2_63 = arith.constant 2 : index
    %144 = memref.load %arg1[%c2_63] : memref<3xf32, #tpu.memory_space<smem>>
    %cst_64 = arith.constant 0.000000e+00 : f32
    %145 = vector.broadcast %cst_64 : f32 to vector<1x128xf32>
    %146 = arith.select %143, %134, %145 : vector<1x128xi1>, vector<1x128xf32>
    %147 = vector.broadcast %144 : f32 to vector<1x128xf32>
    %148 = arith.mulf %147, %146 : vector<1x128xf32>
    %149 = arith.addf %133, %148 : vector<1x128xf32>
    %150 = arith.negf %149 : vector<1x128xf32>
    %151 = math.exp %150 : vector<1x128xf32>
    %cst_65 = arith.constant 1.000000e+00 : f32
    %152 = vector.broadcast %cst_65 : f32 to vector<1x128xf32>
    %153 = arith.addf %152, %151 : vector<1x128xf32>
    %154 = arith.divf %152, %153 : vector<1x128xf32>
    %c2_66 = arith.constant 2 : index
    %c0_67 = arith.constant 0 : index
    %c0_68 = arith.constant 0 : index
    %155 = vector.load %arg2[%c2_66, %c0_67, %c0_68] : memref<4x8x128xf32, #tpu.memory_space<vmem>>, vector<1x8x128xf32>
    %156 = vector.shape_cast %155 : vector<1x8x128xf32> to vector<8x128xf32>
    %157 = vector.broadcast %154 : vector<1x128xf32> to vector<8x128xf32>
    %158 = arith.mulf %156, %157 : vector<8x128xf32>
    %c2_69 = arith.constant 2 : index
    %c0_70 = arith.constant 0 : index
    %c0_71 = arith.constant 0 : index
    %159 = vector.load %arg3[%c2_69, %c0_70, %c0_71] : memref<4x8x128xf32, #tpu.memory_space<vmem>>, vector<1x8x128xf32>
    %160 = vector.shape_cast %159 : vector<1x8x128xf32> to vector<8x128xf32>
    %161 = vector.shape_cast %158 : vector<8x128xf32> to vector<1x8x128xf32>
    tpu.vector_store %arg3[%c2_69, %c0_70, %c0_71], %161 {strides = array<i32>} : memref<4x8x128xf32, #tpu.memory_space<vmem>>, vector<1x8x128xf32>,
    %c3 = arith.constant 3 : index
    %c0_72 = arith.constant 0 : index
    %c0_73 = arith.constant 0 : index
    %162 = vector.load %arg2[%c3, %c0_72, %c0_73] : memref<4x8x128xf32, #tpu.memory_space<vmem>>, vector<1x8x128xf32>
    %163 = vector.shape_cast %162 : vector<1x8x128xf32> to vector<8x128xf32>
    %cst_74 = arith.constant dense<0.000000e+00> : vector<128xf32>
    %164 = vector.multi_reduction <add>, %163, %cst_74 [0] : vector<8x128xf32> to vector<128xf32>
    %165 = vector.shape_cast %164 : vector<128xf32> to vector<1x128xf32>
    %cst_75 = arith.constant 1.250000e-01 : f32
    %166 = vector.broadcast %cst_75 : f32 to vector<1x128xf32>
    %167 = arith.mulf %165, %166 : vector<1x128xf32>
    %168 = tpu.iota {dimensions = array<i32: 1>} : vector<1x128xi32>
    %c1_76 = arith.constant 1 : index
    %169 = memref.load %arg1[%c1_76] : memref<3xf32, #tpu.memory_space<smem>>
    %170 = vector.broadcast %169 : f32 to vector<1x128xf32>
    %171 = arith.mulf %170, %167 : vector<1x128xf32>
    %c1_i32_77 = arith.constant 1 : i32
    %172 = tpu.dynamic_rotate %167 by %c1_i32_77 dim 1 : vector<1x128xf32>, i32 -> vector<1x128xf32>
    %c-1_i32_78 = arith.constant -1 : i32
    %173 = vector.broadcast %c-1_i32_78 : i32 to vector<1x128xi32>
    %174 = arith.addi %168, %173 : vector<1x128xi32>
    %c0_i32_79 = arith.constant 0 : i32
    %175 = vector.broadcast %c0_i32_79 : i32 to vector<1x128xi32>
    %176 = arith.cmpi sge, %174, %175 : vector<1x128xi32>
    %c-1_i32_80 = arith.constant -1 : i32
    %177 = vector.broadcast %c-1_i32_80 : i32 to vector<1x128xi32>
    %178 = arith.addi %168, %177 : vector<1x128xi32>
    %c128_i32_81 = arith.constant 128 : i32
    %179 = vector.broadcast %c128_i32_81 : i32 to vector<1x128xi32>
    %180 = arith.cmpi slt, %178, %179 : vector<1x128xi32>
    %181 = arith.andi %176, %180 : vector<1x128xi1>
    %c0_82 = arith.constant 0 : index
    %182 = memref.load %arg1[%c0_82] : memref<3xf32, #tpu.memory_space<smem>>
    %cst_83 = arith.constant 0.000000e+00 : f32
    %183 = vector.broadcast %cst_83 : f32 to vector<1x128xf32>
    %184 = arith.select %181, %172, %183 : vector<1x128xi1>, vector<1x128xf32>
    %185 = vector.broadcast %182 : f32 to vector<1x128xf32>
    %186 = arith.mulf %185, %184 : vector<1x128xf32>
    %187 = arith.addf %171, %186 : vector<1x128xf32>
    %c127_i32_84 = arith.constant 127 : i32
    %188 = tpu.dynamic_rotate %167 by %c127_i32_84 dim 1 : vector<1x128xf32>, i32 -> vector<1x128xf32>
    %c1_i32_85 = arith.constant 1 : i32
    %189 = vector.broadcast %c1_i32_85 : i32 to vector<1x128xi32>
    %190 = arith.addi %168, %189 : vector<1x128xi32>
    %c0_i32_86 = arith.constant 0 : i32
    %191 = vector.broadcast %c0_i32_86 : i32 to vector<1x128xi32>
    %192 = arith.cmpi sge, %190, %191 : vector<1x128xi32>
    %c1_i32_87 = arith.constant 1 : i32
    %193 = vector.broadcast %c1_i32_87 : i32 to vector<1x128xi32>
    %194 = arith.addi %168, %193 : vector<1x128xi32>
    %c128_i32_88 = arith.constant 128 : i32
    %195 = vector.broadcast %c128_i32_88 : i32 to vector<1x128xi32>
    %196 = arith.cmpi slt, %194, %195 : vector<1x128xi32>
    %197 = arith.andi %192, %196 : vector<1x128xi1>
    %c2_89 = arith.constant 2 : index
    %198 = memref.load %arg1[%c2_89] : memref<3xf32, #tpu.memory_space<smem>>
    %cst_90 = arith.constant 0.000000e+00 : f32
    %199 = vector.broadcast %cst_90 : f32 to vector<1x128xf32>
    %200 = arith.select %197, %188, %199 : vector<1x128xi1>, vector<1x128xf32>
    %201 = vector.broadcast %198 : f32 to vector<1x128xf32>
    %202 = arith.mulf %201, %200 : vector<1x128xf32>
    %203 = arith.addf %187, %202 : vector<1x128xf32>
    %204 = arith.negf %203 : vector<1x128xf32>
    %205 = math.exp %204 : vector<1x128xf32>
    %cst_91 = arith.constant 1.000000e+00 : f32
    %206 = vector.broadcast %cst_91 : f32 to vector<1x128xf32>
    %207 = arith.addf %206, %205 : vector<1x128xf32>
    %208 = arith.divf %206, %207 : vector<1x128xf32>
    %c3_92 = arith.constant 3 : index
    %c0_93 = arith.constant 0 : index
    %c0_94 = arith.constant 0 : index
    %209 = vector.load %arg2[%c3_92, %c0_93, %c0_94] : memref<4x8x128xf32, #tpu.memory_space<vmem>>, vector<1x8x128xf32>
    %210 = vector.shape_cast %209 : vector<1x8x128xf32> to vector<8x128xf32>
    %211 = vector.broadcast %208 : vector<1x128xf32> to vector<8x128xf32>
    %212 = arith.mulf %210, %211 : vector<8x128xf32>
    %c3_95 = arith.constant 3 : index
    %c0_96 = arith.constant 0 : index
    %c0_97 = arith.constant 0 : index
    %213 = vector.load %arg3[%c3_95, %c0_96, %c0_97] : memref<4x8x128xf32, #tpu.memory_space<vmem>>, vector<1x8x128xf32>
    %214 = vector.shape_cast %213 : vector<1x8x128xf32> to vector<8x128xf32>
    %215 = vector.shape_cast %212 : vector<8x128xf32> to vector<1x8x128xf32>
    tpu.vector_store %arg3[%c3_95, %c0_96, %c0_97], %215 {strides = array<i32>} : memref<4x8x128xf32, #tpu.memory_space<vmem>>, vector<1x8x128xf32>,
    return
  }
  func.func @transform_0(%arg0: i32) -> i32 {
    %c0_i32 = arith.constant 0 : i32
    %c0_i32_0 = arith.constant 0 : i32
    return %c0_i32 : i32
  }
  func.func @transform_1(%arg0: i32) -> (i32, i32, i32) {
    %c0_i32 = arith.constant 0 : i32
    %c0_i32_0 = arith.constant 0 : i32
    %c0_i32_1 = arith.constant 0 : i32
    return %arg0, %c0_i32, %c0_i32_0 : i32, i32, i32
  }
  func.func @transform_2(%arg0: i32) -> (i32, i32, i32) {
    %c0_i32 = arith.constant 0 : i32
    %c0_i32_0 = arith.constant 0 : i32
    %c0_i32_1 = arith.constant 0 : i32
    return %arg0, %c0_i32, %c0_i32_0 : i32, i32, i32
  }
}

</mosaic_0001>

<llo_original>
// kernel: tpu_custom_call.1
$region0: #{tpu_custom_call.1}
  #allocation0 [shape = 'u32[]', space=smem, size = 0x4, offset = 0x4, fixed_abs, tag = 'smem constant byte address 0x4 - core index']
  #allocation1 [shape = 'u32[72,128]{1,0:T(1,128)}', space=vmem, size = 0x9000, scoped, tag = 'internal scratch']
  %s0 = inlined_call_operand.hbm [shape: f32[3], index: 0, kind: input, shape index: {}]
  %s1 = inlined_call_operand.hbm [shape: f32[8,8,128], index: 1, kind: input, shape index: {}]
  %s2 = inlined_call_operand.hbm [shape: f32[8,8,128], index: 2, kind: output, shape index: {}]
  %s3 = sld [smem:[#allocation0]]
  $region49: #{tpu_custom_call.1} parent=0
    _
  %s5 = ssub.s32 1, %s3
  %s6 = scalar_select 0, %s5, %s3
  $region1: #{tpu_custom_call.1} parent=0
    #allocation2 [shape = 'u8[512]{0}', space=smem, size = 0x200, scoped, tag = 'input window, operand 0, single buffered']
    #allocation3 [shape = 's32[2]{0}', space=sflag, size = 0x8, scoped, tag = 'scoped memory for tpu_custom_call.1']
    #allocation4 [shape = 's32[2]{0}', space=sflag, size = 0x8, scoped, tag = 'scoped memory for tpu_custom_call.1']
    #allocation5 [shape = 's32[2]{0}', space=sflag, size = 0x8, scoped, tag = 'scoped memory for tpu_custom_call.1']
    #allocation6 [shape = 'u8[32768]{0}', space=vmem, size = 0x8000, scoped, tag = 'input window, operand 1']
    #allocation7 [shape = 'u8[32768]{0}', space=vmem, size = 0x8000, scoped, tag = 'output window, operand 0']
    %7 = vsyncpa [#allocation5], 0
    %8 = vsyncpa [#allocation3], 0
    %s9 = scalar_lea.sflag [#allocation3], 1
    %10 = vsyncpa %s9, 0
    %11 = vsyncpa [#allocation4], 0
    %s12 = scalar_lea.sflag [#allocation4], 1
    %13 = vsyncpa %s12, 0
    loop: start=0, step=1, limit=4
    $region2: #{tpu_custom_call.1} parent=1 // loop_pre_header
      _
    $region3: #{tpu_custom_call.1} parent=1 // loop_header
      %s15 = sphi 0, %s19
      %p16 = scmp.ge.s32.totalorder %s15, 4
      %s23 = sphi 0, %s23
      %s25 = sphi 0, %s23
      %s26 = sphi 0, %s25
      %s40 = sphi 0, %s26
      %s46 = sphi 0, %s48
      %s49 = sphi 0, %s46
      %s50 = sphi 0, %s49
      %s66 = sphi 0, %s50
      %s72 = sphi 0, %s74
      %s75 = sphi 0, %s72
      %s76 = sphi 0, %s75
      %s92 = sphi 0, %s76
    $region4: #{tpu_custom_call.1} parent=1 // loop_header_branch
      %18 = sbr.rel (%p16) target = $region8
    $region5: #{tpu_custom_call.1} parent=1 // loop_body
      %s20 = ssub.s32 %s15, 1
      %s21 = ssub.s32 %s15, 2
      %s22 = sadd.s32 %s15, 1
      %s24 = sadd.s32 %s23, 1
      %p27 = scmp.eq.s32.totalorder %s15, 1
      %p28 = scmp.ne.s32.totalorder %s23, %s25
      %p29 = scmp.eq.s32.totalorder %s15, 0
      %p30 = por %p28, %p29
      %p31 = scmp.ne.s32.totalorder %s23, %s25
      %p32 = scmp.eq.s32.totalorder %s20, 1
      %p33 = por %p31, %p32
      %p34 = scmp.ne.s32.totalorder %s25, %s26
      %p35 = scmp.eq.s32.totalorder %s20, 0
      %p36 = por %p34, %p35
      %p37 = scmp.ne.s32.totalorder %s25, %s26
      %p38 = scmp.eq.s32.totalorder %s21, 1
      %p39 = por %p37, %p38
      %p41 = scmp.ne.s32.totalorder %s26, %s40
      %p42 = scmp.eq.s32.totalorder %s21, 0
      %p43 = por %p41, %p42
      %s44 = ssub.s32 %s15, %s22
      %p45 = scmp.eq.s32.totalorder %s44, 0
      %s47 = sadd.s32 %s46, 1
      %s48 = scalar_select %p45, %s46, %s47
      %p51 = pneg %p45
      %p52 = scmp.eq.s32.totalorder %s15, 1
      %p53 = por %p51, %p52
      %p54 = scmp.ne.s32.totalorder %s46, %s49
      %p55 = scmp.eq.s32.totalorder %s15, 0
      %p56 = por %p54, %p55
      %p57 = scmp.ne.s32.totalorder %s46, %s49
      %p58 = scmp.eq.s32.totalorder %s20, 1
      %p59 = por %p57, %p58
      %p60 = scmp.ne.s32.totalorder %s49, %s50
      %p61 = scmp.eq.s32.totalorder %s20, 0
      %p62 = por %p60, %p61
      %p63 = scmp.ne.s32.totalorder %s49, %s50
      %p64 = scmp.eq.s32.totalorder %s21, 1
      %p65 = por %p63, %p64
      %p67 = scmp.ne.s32.totalorder %s50, %s66
      %p68 = scmp.eq.s32.totalorder %s21, 0
      %p69 = por %p67, %p68
      %s70 = ssub.s32 %s15, %s22
      %p71 = scmp.eq.s32.totalorder %s70, 0
      %s73 = sadd.s32 %s72, 1
      %s74 = scalar_select %p71, %s72, %s73
      %p77 = pneg %p71
      %p78 = scmp.eq.s32.totalorder %s15, 1
      %p79 = por %p77, %p78
      %p80 = scmp.ne.s32.totalorder %s72, %s75
      %p81 = scmp.eq.s32.totalorder %s15, 0
      %p82 = por %p80, %p81
      %p83 = scmp.ne.s32.totalorder %s72, %s75
      %p84 = scmp.eq.s32.totalorder %s20, 1
      %p85 = por %p83, %p84
      %p86 = scmp.ne.s32.totalorder %s75, %s76
      %p87 = scmp.eq.s32.totalorder %s20, 0
      %p88 = por %p86, %p87
      %p89 = scmp.ne.s32.totalorder %s75, %s76
      %p90 = scmp.eq.s32.totalorder %s21, 1
      %p91 = por %p89, %p90
      %p93 = scmp.ne.s32.totalorder %s76, %s92
      %p94 = scmp.eq.s32.totalorder %s21, 0
      %p95 = por %p93, %p94
      %p96 = scmp.le.s32.totalorder 1, %s15
      %p97 = scmp.lt.s32.totalorder %s15, 3
      %p98 = pnand %p96, %p97
      %p99 = pneg %p98
      // Predicated region
      $region9: #{tpu_custom_call.1} parent=5 // pred_check
        _
      $region10: #{tpu_custom_call.1} parent=5 // pred_check_branch
        %101 = sbr.rel (%p98) target = $region12
      $region11: #{tpu_custom_call.1} parent=5 // pred_region
        %s102 = ssub.s32 %s15, 1
        // Predicated region
        $region13: #{tpu_custom_call.1} parent=11 // pred_check
          %p103 = pneg %p36
        $region14: #{tpu_custom_call.1} parent=11 // pred_check_branch
          %105 = sbr.rel (%p103) target = $region16
        $region15: #{tpu_custom_call.1} parent=11 // pred_region
          %107 = vsyncadd [#allocation5], 0
          %s109 = sshll.u32 %s0, 4
          %s110 = int_to_ptr.hbm [resolvable:$true] %s109
          %112 = dma.hbm_to_smem %s110, 16, [#allocation2], [#allocation5]
        $region16: #{tpu_custom_call.1} parent=11 // pred_fallthru
          _
      $region12: #{tpu_custom_call.1} parent=5 // pred_fallthru
        _
      %p113 = scmp.lt.s32.totalorder %s15, 2
      // Predicated region
      $region17: #{tpu_custom_call.1} parent=5 // pred_check
        %p114 = pneg %p113
      $region18: #{tpu_custom_call.1} parent=5 // pred_check_branch
        %116 = sbr.rel (%p114) target = $region20
      $region19: #{tpu_custom_call.1} parent=5 // pred_region
        // Predicated region
        $region21: #{tpu_custom_call.1} parent=19 // pred_check
          %p117 = pneg %p56
        $region22: #{tpu_custom_call.1} parent=19 // pred_check_branch
          %119 = sbr.rel (%p117) target = $region24
        $region23: #{tpu_custom_call.1} parent=19 // pred_region
          %s120 = sand.u32 %s46, 1
          %s121 = scalar_lea.sflag [#allocation3], %s120
          %s122 = sand.u32 %s46, 1
          %s123 = smul.addr %s122, 32
          %s124 = scalar_lea.vmem [#allocation6], %s123
          %s125 = smul.u32 4, %s15
          %127 = vsyncadd %s121, 0
          %s128 = smul.addr %s125, 8
          %s129 = scalar_lea.hbm %s1, %s128
          %s130 = sshll.u32 %s129, 4
          %s131 = int_to_ptr.hbm [resolvable:$true] %s130
          %s132 = sshll.u32 %s124, 4
          %s133 = int_to_ptr.vmem [resolvable:$true] %s132
          %138 = dma.hbm_to_vmem [thread:$0]  %s131, 512, %s133, %s121, 128, 128, 8
        $region24: #{tpu_custom_call.1} parent=19 // pred_fallthru
          _
      $region20: #{tpu_custom_call.1} parent=5 // pred_fallthru
        _
      %p139 = scmp.le.s32.totalorder 1, %s15
      %p140 = scmp.lt.s32.totalorder %s15, 3
      %p141 = pnand %p139, %p140
      %p142 = pneg %p141
      // Predicated region
      $region25: #{tpu_custom_call.1} parent=5 // pred_check
        _
      $region26: #{tpu_custom_call.1} parent=5 // pred_check_branch
        %144 = sbr.rel (%p141) target = $region28
      $region27: #{tpu_custom_call.1} parent=5 // pred_region
        %s145 = ssub.s32 %s15, 1
        // Predicated region
        $region29: #{tpu_custom_call.1} parent=27 // pred_check
          %p146 = pneg %p36
        $region30: #{tpu_custom_call.1} parent=27 // pred_check_branch
          %148 = sbr.rel (%p146) target = $region32
        $region31: #{tpu_custom_call.1} parent=27 // pred_region
          %150 = dma.done [#allocation5], 16
        $region32: #{tpu_custom_call.1} parent=27 // pred_fallthru
          _
        %s151 = sand.u32 %s49, 1
        %s152 = scalar_lea.sflag [#allocation3], %s151
        %s153 = sand.u32 %s49, 1
        %s154 = smul.addr %s153, 32
        %s155 = scalar_lea.vmem [#allocation6], %s154
        // Predicated region
        $region33: #{tpu_custom_call.1} parent=27 // pred_check
          %p156 = pneg %p62
        $region34: #{tpu_custom_call.1} parent=27 // pred_check_branch
          %158 = sbr.rel (%p156) target = $region36
        $region35: #{tpu_custom_call.1} parent=27 // pred_region
          %160 = dma.done %s152, 512
        $region36: #{tpu_custom_call.1} parent=27 // pred_fallthru
          _
        %161 = sfence
        %p162 = pneg %p36
        %p163 = pneg %p33
        %s164 = sand.u32 %s49, 1
        %s165 = scalar_lea.sflag [#allocation3], %s164
        %s166 = sand.u32 %s49, 1
        %s167 = smul.addr %s166, 32
        %s168 = scalar_lea.vmem [#allocation6], %s167
        %p169 = pneg %p62
        %p170 = pneg %p59
        %p171 = pneg %p88
        %p172 = pneg %p85
        %s173 = sand.u32 %s75, 1
        %s174 = scalar_lea.sflag [#allocation4], %s173
        %s175 = sand.u32 %s75, 1
        %s176 = smul.addr %s175, 32
        %s177 = scalar_lea.vmem [#allocation7], %s176
        %s178 = smul.u32 4, %s20
        %s179 = smul.u32 4, %s20
        %v180 = vld [vmem:[%s155] sm:$0xff]
        %v181 = vrot.slane %v180, 4
        %v182 = vadd.f32 %v180, %v181
        %v183 = vrot.slane %v182, 2
        %v184 = vadd.f32 %v182, %v183
        %v185 = vrot.slane %v184, 1
        %v186 = vadd.f32 %v184, %v185
        %v187 = vmul.f32 %v186, 0.125
        %v188 = vlaneseq
        %v189 = vand.u32 %v188, 127
        %s190 = sld [smem:[#allocation2 + $0x1]]
        %v191 = vstv %s190
        %v192 = vmul.f32 %v191, %v187
        %193 = vrot.lane.b32.xlu0 %v187, 1
        %v194 = vpop.permute.xlu0 %193
        %v195 = vadd.s32 %v189, 4294967295
        %vm196 = vcmp.ge.s32.totalorder %v195, 0
        %vm197 = vcmp.lt.s32.totalorder %v195, 128
        %vm198 = vmand %vm196, %vm197
        %s199 = sld [smem:[#allocation2]]
        %v200 = vsel %vm198, %v194, 0.0
        %v201 = vstv %s199
        %v202 = vmul.f32 %v201, %v200
        %v203 = vadd.f32 %v192, %v202
        %204 = vrot.lane.b32.xlu0 %v187, 127
        %v205 = vpop.permute.xlu0 %204
        %v206 = vadd.s32 %v189, 1
        %vm207 = vcmp.ge.s32.totalorder %v206, 0
        %vm208 = vcmp.lt.s32.totalorder %v206, 128
        %vm209 = vmand %vm207, %vm208
        %s210 = sld [smem:[#allocation2 + $0x2]]
        %v211 = vsel %vm209, %v205, 0.0
        %v212 = vstv %s210
        %v213 = vmul.f32 %v212, %v211
        %v214 = vadd.f32 %v203, %v213
        %v215 = vxor.u32 %v214, 2147483648
        %v216 = vmul.f32 %v215, 1.442695
        %v217 = vpow.pop %v216
        %v218 = vadd.f32 %v217, 1.0
        %v219 = vrcp.pop %v218
        %v220 = vmul.f32 %v218, %v219
        %v221 = vsub.f32 1.0, %v220
        %v222 = vmul.f32 %v219, %v221
        %v223 = vadd.f32 %v219, %v222
        %vm224 = vweird.f32 %v218
        %vm225 = vweird.f32 %v219
        %vm226 = vmor %vm224, %vm225
        %v227 = vsel %vm226, %v219, %v223
        %v228 = vand.u32 2147483647, %v218
        %vm229 = vcmp.eq.f32.partialorder %v228, 8.507059e+37
        %v230 = vand.u32 %v218, 2147483648
        %v231 = vor.u32 1.1754944e-38, %v230
        %v232 = vsel %vm229, %v231, %v227
        %v233 = vmul.f32 1.0, %v232
        %v234 = vperm.slane %v233, 0
        %v235 = vmul.f32 %v180, %v234
        %236 = vst [vmem:[%s177] sm:$0xff] %v235
        %s237 = scalar_lea.vmem %s155, 8 [#allocation6]
        %v238 = vld [vmem:[%s237] sm:$0xff]
        %v239 = vrot.slane %v238, 4
        %v240 = vadd.f32 %v238, %v239
        %v241 = vrot.slane %v240, 2
        %v242 = vadd.f32 %v240, %v241
        %v243 = vrot.slane %v242, 1
        %v244 = vadd.f32 %v242, %v243
        %v245 = vmul.f32 %v244, 0.125
        %s246 = sld [smem:[#allocation2 + $0x1]]
        %v247 = vstv %s246
        %v248 = vmul.f32 %v247, %v245
        %249 = vrot.lane.b32.xlu0 %v245, 1
        %v250 = vpop.permute.xlu0 %249
        %s251 = sld [smem:[#allocation2]]
        %v252 = vsel %vm198, %v250, 0.0
        %v253 = vstv %s251
        %v254 = vmul.f32 %v253, %v252
        %v255 = vadd.f32 %v248, %v254
        %256 = vrot.lane.b32.xlu0 %v245, 127
        %v257 = vpop.permute.xlu0 %256
        %s258 = sld [smem:[#allocation2 + $0x2]]
        %v259 = vsel %vm209, %v257, 0.0
        %v260 = vstv %s258
        %v261 = vmul.f32 %v260, %v259
        %v262 = vadd.f32 %v255, %v261
        %v263 = vxor.u32 %v262, 2147483648
        %v264 = vmul.f32 %v263, 1.442695
        %v265 = vpow.pop %v264
        %v266 = vadd.f32 %v265, 1.0
        %v267 = vrcp.pop %v266
        %v268 = vmul.f32 %v266, %v267
        %v269 = vsub.f32 1.0, %v268
        %v270 = vmul.f32 %v267, %v269
        %v271 = vadd.f32 %v267, %v270
        %vm272 = vweird.f32 %v266
        %vm273 = vweird.f32 %v267
        %vm274 = vmor %vm272, %vm273
        %v275 = vsel %vm274, %v267, %v271
        %v276 = vand.u32 2147483647, %v266
        %vm277 = vcmp.eq.f32.partialorder %v276, 8.507059e+37
        %v278 = vand.u32 %v266, 2147483648
        %v279 = vor.u32 1.1754944e-38, %v278
        %v280 = vsel %vm277, %v279, %v275
        %v281 = vmul.f32 1.0, %v280
        %v282 = vperm.slane %v281, 0
        %v283 = vmul.f32 %v238, %v282
        %s284 = scalar_lea.vmem %s177, 8 [#allocation7]
        %285 = vst [vmem:[%s284] sm:$0xff] %v283
        %s286 = scalar_lea.vmem %s155, 16 [#allocation6]
        %v287 = vld [vmem:[%s286] sm:$0xff]
        %v288 = vrot.slane %v287, 4
        %v289 = vadd.f32 %v287, %v288
        %v290 = vrot.slane %v289, 2
        %v291 = vadd.f32 %v289, %v290
        %v292 = vrot.slane %v291, 1
        %v293 = vadd.f32 %v291, %v292
        %v294 = vmul.f32 %v293, 0.125
        %s295 = sld [smem:[#allocation2 + $0x1]]
        %v296 = vstv %s295
        %v297 = vmul.f32 %v296, %v294
        %298 = vrot.lane.b32.xlu0 %v294, 1
        %v299 = vpop.permute.xlu0 %298
        %s300 = sld [smem:[#allocation2]]
        %v301 = vsel %vm198, %v299, 0.0
        %v302 = vstv %s300
        %v303 = vmul.f32 %v302, %v301
        %v304 = vadd.f32 %v297, %v303
        %305 = vrot.lane.b32.xlu0 %v294, 127
        %v306 = vpop.permute.xlu0 %305
        %s307 = sld [smem:[#allocation2 + $0x2]]
        %v308 = vsel %vm209, %v306, 0.0
        %v309 = vstv %s307
        %v310 = vmul.f32 %v309, %v308
        %v311 = vadd.f32 %v304, %v310
        %v312 = vxor.u32 %v311, 2147483648
        %v313 = vmul.f32 %v312, 1.442695
        %v314 = vpow.pop %v313
        %v315 = vadd.f32 %v314, 1.0
        %v316 = vrcp.pop %v315
        %v317 = vmul.f32 %v315, %v316
        %v318 = vsub.f32 1.0, %v317
        %v319 = vmul.f32 %v316, %v318
        %v320 = vadd.f32 %v316, %v319
        %vm321 = vweird.f32 %v315
        %vm322 = vweird.f32 %v316
        %vm323 = vmor %vm321, %vm322
        %v324 = vsel %vm323, %v316, %v320
        %v325 = vand.u32 2147483647, %v315
        %vm326 = vcmp.eq.f32.partialorder %v325, 8.507059e+37
        %v327 = vand.u32 %v315, 2147483648
        %v328 = vor.u32 1.1754944e-38, %v327
        %v329 = vsel %vm326, %v328, %v324
        %v330 = vmul.f32 1.0, %v329
        %v331 = vperm.slane %v330, 0
        %v332 = vmul.f32 %v287, %v331
        %s333 = scalar_lea.vmem %s177, 16 [#allocation7]
        %334 = vst [vmem:[%s333] sm:$0xff] %v332
        %s335 = scalar_lea.vmem %s155, 24 [#allocation6]
        %v336 = vld [vmem:[%s335] sm:$0xff]
        %v337 = vrot.slane %v336, 4
        %v338 = vadd.f32 %v336, %v337
        %v339 = vrot.slane %v338, 2
        %v340 = vadd.f32 %v338, %v339
        %v341 = vrot.slane %v340, 1
        %v342 = vadd.f32 %v340, %v341
        %v343 = vmul.f32 %v342, 0.125
        %s344 = sld [smem:[#allocation2 + $0x1]]
        %v345 = vstv %s344
        %v346 = vmul.f32 %v345, %v343
        %347 = vrot.lane.b32.xlu0 %v343, 1
        %v348 = vpop.permute.xlu0 %347
        %s349 = sld [smem:[#allocation2]]
        %v350 = vsel %vm198, %v348, 0.0
        %v351 = vstv %s349
        %v352 = vmul.f32 %v351, %v350
        %v353 = vadd.f32 %v346, %v352
        %354 = vrot.lane.b32.xlu0 %v343, 127
        %v355 = vpop.permute.xlu0 %354
        %s356 = sld [smem:[#allocation2 + $0x2]]
        %v357 = vsel %vm209, %v355, 0.0
        %v358 = vstv %s356
        %v359 = vmul.f32 %v358, %v357
        %v360 = vadd.f32 %v353, %v359
        %v361 = vxor.u32 %v360, 2147483648
        %v362 = vmul.f32 %v361, 1.442695
        %v363 = vpow.pop %v362
        %v364 = vadd.f32 %v363, 1.0
        %v365 = vrcp.pop %v364
        %v366 = vmul.f32 %v364, %v365
        %v367 = vsub.f32 1.0, %v366
        %v368 = vmul.f32 %v365, %v367
        %v369 = vadd.f32 %v365, %v368
        %vm370 = vweird.f32 %v364
        %vm371 = vweird.f32 %v365
        %vm372 = vmor %vm370, %vm371
        %v373 = vsel %vm372, %v365, %v369
        %v374 = vand.u32 2147483647, %v364
        %vm375 = vcmp.eq.f32.partialorder %v374, 8.507059e+37
        %v376 = vand.u32 %v364, 2147483648
        %v377 = vor.u32 1.1754944e-38, %v376
        %v378 = vsel %vm375, %v377, %v373
        %v379 = vmul.f32 1.0, %v378
        %v380 = vperm.slane %v379, 0
        %v381 = vmul.f32 %v336, %v380
        %s382 = scalar_lea.vmem %s177, 24 [#allocation7]
        %383 = vst [vmem:[%s382] sm:$0xff] %v381
        %s384 = sand.u32 %s75, 1
        %s385 = scalar_lea.sflag [#allocation4], %s384
        %s386 = sand.u32 %s75, 1
        %s387 = smul.addr %s386, 32
        %s388 = scalar_lea.vmem [#allocation7], %s387
        // Predicated region
        $region37: #{tpu_custom_call.1} parent=27 // pred_check
          %p389 = pneg %p85
        $region38: #{tpu_custom_call.1} parent=27 // pred_check_branch
          %391 = sbr.rel (%p389) target = $region40
        $region39: #{tpu_custom_call.1} parent=27 // pred_region
          %s392 = smul.u32 4, %s20
          %394 = vsyncadd %s385, 0
          %s395 = smul.addr %s392, 8
          %s396 = scalar_lea.hbm %s2, %s395
          %s397 = sshll.u32 %s388, 4
          %s398 = int_to_ptr.vmem [resolvable:$true] %s397
          %s399 = sshll.u32 %s396, 4
          %s400 = int_to_ptr.hbm [resolvable:$true] %s399
          %405 = dma.vmem_to_hbm [thread:$0]  %s398, 512, %s400, %s385, 128, 128, 8
        $region40: #{tpu_custom_call.1} parent=27 // pred_fallthru
          _
      $region28: #{tpu_custom_call.1} parent=5 // pred_fallthru
        _
      %p406 = scmp.le.s32.totalorder 2, %s15
      // Predicated region
      $region41: #{tpu_custom_call.1} parent=5 // pred_check
        %p407 = pneg %p406
      $region42: #{tpu_custom_call.1} parent=5 // pred_check_branch
        %409 = sbr.rel (%p407) target = $region44
      $region43: #{tpu_custom_call.1} parent=5 // pred_region
        %s410 = ssub.s32 %s15, 2
        // Predicated region
        $region45: #{tpu_custom_call.1} parent=43 // pred_check
          %p411 = pneg %p91
        $region46: #{tpu_custom_call.1} parent=43 // pred_check_branch
          %413 = sbr.rel (%p411) target = $region48
        $region47: #{tpu_custom_call.1} parent=43 // pred_region
          %s414 = sand.u32 %s76, 1
          %s415 = scalar_lea.sflag [#allocation4], %s414
          %s416 = sand.u32 %s76, 1
          %s417 = smul.addr %s416, 32
          %s418 = scalar_lea.vmem [#allocation7], %s417
          %420 = dma.done %s415, 512
        $region48: #{tpu_custom_call.1} parent=43 // pred_fallthru
          _
      $region44: #{tpu_custom_call.1} parent=5 // pred_fallthru
        _
    $region6: #{tpu_custom_call.1} parent=1 // loop_footer
      %s19 = sadd.s32 1, %s15
    $region7: #{tpu_custom_call.1} parent=1 // loop_footer_branch
      %14 = sbr.rel target = $region3
    $region8: #{tpu_custom_call.1} parent=1 // loop_exit
      _
    %421 = vsyncpa [#allocation3], 1
    %s422 = scalar_lea.sflag [#allocation3], 1
    %423 = vsyncpa %s422, 1
    %424 = vsyncpa [#allocation4], 1
    %s425 = scalar_lea.sflag [#allocation4], 1
    %426 = vsyncpa %s425, 1
    %427 = vsyncpa [#allocation5], 1
    %s428 = scalar_lea.sflag [#allocation5], 1
    %429 = vsyncpa %s428, 1

</llo_original>
